<compile_context>
chip_gen: v5e
topology: v5e:2x2
jax: 0.10.0
libtpu: 0.0.40
codegen_flags: <defaults>
</compile_context>

<pallas_src>
import jax
import jax.numpy as jnp
from jax import lax
from jax.experimental import pallas as pl
from jax.experimental.pallas import tpu as pltpu

STATE_SIZE = 2
HIDDEN = 128
ACTION_SIZE = 4
HEAD_PAD = 8       # fused head rows: 4 policy + 1 flow + 3 zero pad = one sublane tile
TB_MAX = 8192      # batch-tile cap (multiple of 128)


def _round_up(x, m):
    return ((x + m - 1) // m) * m


def gflownet_kernel(x_ref, w1_ref, b1_ref, w23T_ref, b23T_ref,
                    log_pfT_ref, log_flowT_ref):
    """One batch tile.

    x_ref         : (TB, 2)    raw states (natural layout, contiguous HBM reads)
    w1_ref        : (2, 128)   embedding weight (VMEM-resident across tiles)
    b1_ref        : (1, 128)   embedding bias
    w23T_ref      : (8, 128)   fused head: rows 0:4 = W2^T, row 4 = W3^T, rows 5:8 = 0
    b23T_ref      : (8, 1)     fused head bias
    log_pfT_ref   : (4, TB)    log-softmax policy, transposed (lane-dense store)
    log_flowT_ref : (1, TB)    log flow, transposed (lane-dense store)
    """
    # Embedding Linear(2 -> 128) on the (otherwise idle) MXU; bias+ReLU on the VPU.
    emb = jnp.dot(x_ref[...], w1_ref[...],
                  preferred_element_type=jnp.float32,
                  precision=lax.Precision.HIGHEST)            # (TB, 128)
    emb = jnp.maximum(emb + b1_ref[...], 0.0)

    # Fused policy + flow head as one MXU matmul, contracting the hidden dim of
    # both operands (A @ B^T) -> (8, TB); no explicit transpose is materialized.
    headT = lax.dot_general(
        w23T_ref[...], emb,
        dimension_numbers=(((1,), (1,)), ((), ())),
        preferred_element_type=jnp.float32,
        precision=lax.Precision.HIGHEST) + b23T_ref[...]      # (8, TB)

    # LogSoftmax over the 4 policy rows (sublane axis), max-subtraction trick.
    logits = headT[0:ACTION_SIZE, :]                           # (4, TB)
    m = jnp.max(logits, axis=0, keepdims=True)                 # (1, TB)
    lse = jnp.log(jnp.sum(jnp.exp(logits - m), axis=0, keepdims=True)) + m

    log_pfT_ref[...] = logits - lse                            # lane-dense (4, TB) store
    log_flowT_ref[...] = headT[ACTION_SIZE:ACTION_SIZE + 1, :]  # lane-dense (1, TB) store


def gflownet_forward(state, params):
    """state: (B, 2) f32 -> (log_pf (B, 4), log_flow squeezed like torch)."""
    w1, b1, w2, b2, w3, b3 = params
    B = state.shape[0]

    # Batch tile: multiple of 128; large enough to amortize per-grid-step
    # overhead, capped so (a) per-tile VMEM stays < ~20 MiB on every generation
    # and (b) the grid keeps >= 2 steps for large B (both v7x TCs engaged).
    TB = min(TB_MAX, max(128, _round_up(pl.cdiv(B, 2), 128)))
    grid = (pl.cdiv(B, TB),)

    # Tiny constant-size head fusion (weights only; no per-batch HBM passes).
    w23T = (jnp.zeros((HEAD_PAD, HIDDEN), jnp.float32)
            .at[:ACTION_SIZE, :].set(w2.T)
            .at[ACTION_SIZE, :].set(w3[:, 0]))
    b23T = (jnp.zeros((HEAD_PAD, 1), jnp.float32)
            .at[:ACTION_SIZE, 0].set(b2[0])
            .at[ACTION_SIZE, 0].set(b3[0, 0]))
    b1r = b1.reshape(1, HIDDEN)

    log_pfT, log_flowT = pl.pallas_call(
        gflownet_kernel,
        grid=grid,
        in_specs=[
            pl.BlockSpec((TB, STATE_SIZE), lambda i: (i, 0)),      # raw states, batch-tiled
            pl.BlockSpec((STATE_SIZE, HIDDEN), lambda i: (0, 0)),  # W1 (resident)
            pl.BlockSpec((1, HIDDEN), lambda i: (0, 0)),           # b1
            pl.BlockSpec((HEAD_PAD, HIDDEN), lambda i: (0, 0)),    # fused head W
            pl.BlockSpec((HEAD_PAD, 1), lambda i: (0, 0)),         # fused head b
        ],
        out_specs=[
            pl.BlockSpec((ACTION_SIZE, TB), lambda i: (0, i)),     # log_pf^T
            pl.BlockSpec((1, TB), lambda i: (0, i)),               # log_flow^T
        ],
        out_shape=[
            jax.ShapeDtypeStruct((ACTION_SIZE, B), jnp.float32),
            jax.ShapeDtypeStruct((1, B), jnp.float32),
        ],
        compiler_params=pltpu.CompilerParams(
            dimension_semantics=("parallel",),       # batch tiles split across v7x TCs
            vmem_limit_bytes=32 * 1024 * 1024),
    )(state, w1, b1r, w23T, b23T)

    log_pf = log_pfT.T                    # (B, 4), matches the torch module
    # Matches torch .squeeze(): (B,) for B > 1, 0-d scalar when B == 1.
    log_flow = jnp.squeeze(log_flowT)
    return log_pf, log_flow


def init_params(key):
    """Deterministic init mimicking PyTorch default Linear init (uniform +-1/sqrt(fan_in))."""
    ks = jax.random.split(key, 6)

    def lin(kw, kb, fan_in, fan_out):
        bound = 1.0 / jnp.sqrt(float(fan_in))
        w = jax.random.uniform(kw, (fan_in, fan_out), jnp.float32, -bound, bound)
        b = jax.random.uniform(kb, (1, fan_out), jnp.float32, -bound, bound)
        return w, b

    w1, b1 = lin(ks[0], ks[1], STATE_SIZE, HIDDEN)
    w2, b2 = lin(ks[2], ks[3], HIDDEN, ACTION_SIZE)
    w3, b3 = lin(ks[4], ks[5], HIDDEN, 1)
    return (w1, b1, w2, b2, w3, b3)


def reference_forward(state, params):
    w1, b1, w2, b2, w3, b3 = params
    hp = lax.Precision.HIGHEST
    emb = jnp.maximum(jnp.dot(state, w1, precision=hp) + b1, 0.0)
    logits = jnp.dot(emb, w2, precision=hp) + b2
    log_pf = jax.nn.log_softmax(logits, axis=-1)
    log_flow = (jnp.dot(emb, w3, precision=hp) + b3).squeeze()
    return log_pf, log_flow


if __name__ == "__main__":
    key = jax.random.PRNGKey(0)
    k_param, k_state1, k_state2 = jax.random.split(key, 3)

    params = init_params(k_param)
    fwd = jax.jit(gflownet_forward)

    # Small-batch check (single tile, ragged trailing columns exercised).
    B = 8
    state = jax.random.normal(k_state1, (B, STATE_SIZE), dtype=jnp.float32)
    log_pf, log_flow = fwd(state, params)
    jax.block_until_ready((log_pf, log_flow))
    ref_pf, ref_flow = reference_forward(state, params)
    assert log_pf.shape == (B, ACTION_SIZE)
    assert log_flow.shape == (B,)
    assert jnp.allclose(log_pf, ref_pf, atol=1e-3, rtol=1e-3)
    assert jnp.allclose(log_flow, ref_flow, atol=1e-3, rtol=1e-3)

    # Multi-tile check (2 grid steps, partial last tile -> exercises tiling,
    # pipelining and boundary handling).
    B2 = 300
    state2 = jax.random.normal(k_state2, (B2, STATE_SIZE), dtype=jnp.float32)
    log_pf2, log_flow2 = fwd(state2, params)
    jax.block_until_ready((log_pf2, log_flow2))
    ref_pf2, ref_flow2 = reference_forward(state2, params)
    assert log_pf2.shape == (B2, ACTION_SIZE)
    assert log_flow2.shape == (B2,)
    assert jnp.allclose(log_pf2, ref_pf2, atol=1e-3, rtol=1e-3)
    assert jnp.allclose(log_flow2, ref_flow2, atol=1e-3, rtol=1e-3)

    print("KERNEL_OK")
</pallas_src>

<mosaic_0001>
module attributes {stable_mosaic.version = 11 : i64} {
  func.func @gflownet_kernel(%arg0: i32, %arg1: memref<128x2xf32, #tpu.memory_space<vmem>>, %arg2: memref<2x128xf32, #tpu.memory_space<vmem>>, %arg3: memref<1x128xf32, #tpu.memory_space<vmem>>, %arg4: memref<8x128xf32, #tpu.memory_space<vmem>>, %arg5: memref<8x1xf32, #tpu.memory_space<vmem>>, %arg6: memref<4x128xf32, #tpu.memory_space<vmem>>, %arg7: memref<1x128xf32, #tpu.memory_space<vmem>>) attributes {dimension_semantics = [#tpu.dimension_semantics<parallel>], iteration_bounds = array<i64: 1>, scalar_prefetch = 0 : i64, scratch_operands = 0 : i64, tpu.core_type = #tpu.core_type<tc>, window_params = [{transform_indices = @transform_0, window_bounds = array<i64: 128, 2>}, {pipeline_mode = #tpu.pipeline_mode<synchronous>, transform_indices = @transform_1, window_bounds = array<i64: 2, 128>}, {pipeline_mode = #tpu.pipeline_mode<synchronous>, transform_indices = @transform_2, window_bounds = array<i64: 1, 128>}, {pipeline_mode = #tpu.pipeline_mode<synchronous>, transform_indices = @transform_3, window_bounds = array<i64: 8, 128>}, {pipeline_mode = #tpu.pipeline_mode<synchronous>, transform_indices = @transform_4, window_bounds = array<i64: 8, 1>}, {transform_indices = @transform_5, window_bounds = array<i64: 4, 128>}, {transform_indices = @transform_6, window_bounds = array<i64: 1, 128>}]} {
    %c0 = arith.constant 0 : index
    %c0_0 = arith.constant 0 : index
    %0 = vector.load %arg1[%c0, %c0_0] : memref<128x2xf32, #tpu.memory_space<vmem>>, vector<128x2xf32>
    %c0_1 = arith.constant 0 : index
    %c0_2 = arith.constant 0 : index
    %1 = vector.load %arg2[%c0_1, %c0_2] : memref<2x128xf32, #tpu.memory_space<vmem>>, vector<2x128xf32>
    %cst = arith.constant dense<0.000000e+00> : vector<128x128xf32>
    %2 = tpu.matmul %0, %1, %cst {dimension_numbers = #tpu.dot_dimension_numbers<[1], [0], [0], [1], [0, 0, 1, 1], [], []>, precision = #tpu.contract_precision<fp32>} : vector<128x2xf32>, vector<2x128xf32>, vector<128x128xf32> -> vector<128x128xf32>
    %c0_3 = arith.constant 0 : index
    %c0_4 = arith.constant 0 : index
    %3 = vector.load %arg3[%c0_3, %c0_4] : memref<1x128xf32, #tpu.memory_space<vmem>>, vector<1x128xf32>
    %4 = vector.broadcast %3 : vector<1x128xf32> to vector<128x128xf32>
    %5 = arith.addf %2, %4 : vector<128x128xf32>
    %cst_5 = arith.constant 0.000000e+00 : f32
    %6 = vector.broadcast %cst_5 : f32 to vector<128x128xf32>
    %7 = arith.maximumf %5, %6 : vector<128x128xf32>
    %c0_6 = arith.constant 0 : index
    %c0_7 = arith.constant 0 : index
    %8 = vector.load %arg4[%c0_6, %c0_7] : memref<8x128xf32, #tpu.memory_space<vmem>>, vector<8x128xf32>
    %cst_8 = arith.constant dense<0.000000e+00> : vector<8x128xf32>
    %9 = tpu.matmul %8, %7, %cst_8 {dimension_numbers = #tpu.dot_dimension_numbers<[1], [1], [0], [0], [0, 0, 1, 0], [], []>, precision = #tpu.contract_precision<fp32>} : vector<8x128xf32>, vector<128x128xf32>, vector<8x128xf32> -> vector<8x128xf32>
    %c0_9 = arith.constant 0 : index
    %c0_10 = arith.constant 0 : index
    %10 = vector.load %arg5[%c0_9, %c0_10] : memref<8x1xf32, #tpu.memory_space<vmem>>, vector<8x1xf32>
    %11 = vector.broadcast %10 : vector<8x1xf32> to vector<8x128xf32>
    %12 = arith.addf %9, %11 : vector<8x128xf32>
    %13 = vector.extract_strided_slice %12 {offsets = [0, 0], sizes = [4, 128], strides = [1, 1]} : vector<8x128xf32> to vector<4x128xf32>
    %cst_11 = arith.constant dense<0xFF800000> : vector<128xf32>
    %14 = vector.multi_reduction <maximumf>, %13, %cst_11 [0] : vector<4x128xf32> to vector<128xf32>
    %15 = vector.shape_cast %14 : vector<128xf32> to vector<1x128xf32>
    %16 = vector.broadcast %15 : vector<1x128xf32> to vector<4x128xf32>
    %17 = arith.subf %13, %16 : vector<4x128xf32>
    %18 = math.exp %17 : vector<4x128xf32>
    %cst_12 = arith.constant dense<0.000000e+00> : vector<128xf32>
    %19 = vector.multi_reduction <add>, %18, %cst_12 [0] : vector<4x128xf32> to vector<128xf32>
    %20 = vector.shape_cast %19 : vector<128xf32> to vector<1x128xf32>
    %21 = math.log %20 : vector<1x128xf32>
    %22 = arith.addf %21, %15 : vector<1x128xf32>
    %23 = vector.broadcast %22 : vector<1x128xf32> to vector<4x128xf32>
    %24 = arith.subf %13, %23 : vector<4x128xf32>
    %c0_13 = arith.constant 0 : index
    %c0_14 = arith.constant 0 : index
    %25 = vector.load %arg6[%c0_13, %c0_14] : memref<4x128xf32, #tpu.memory_space<vmem>>, vector<4x128xf32>
    tpu.vector_store %arg6[%c0_13, %c0_14], %24 {strides = array<i32>} : memref<4x128xf32, #tpu.memory_space<vmem>>, vector<4x128xf32>,
    %26 = vector.extract_strided_slice %12 {offsets = [4, 0], sizes = [1, 128], strides = [1, 1]} : vector<8x128xf32> to vector<1x128xf32>
    %c0_15 = arith.constant 0 : index
    %c0_16 = arith.constant 0 : index
    %27 = vector.load %arg7[%c0_15, %c0_16] : memref<1x128xf32, #tpu.memory_space<vmem>>, vector<1x128xf32>
    tpu.vector_store %arg7[%c0_15, %c0_16], %26 {strides = array<i32>} : memref<1x128xf32, #tpu.memory_space<vmem>>, vector<1x128xf32>,
    return
  }
  func.func @transform_0(%arg0: i32) -> (i32, i32) {
    %c0_i32 = arith.constant 0 : i32
    %c0_i32_0 = arith.constant 0 : i32
    return %arg0, %c0_i32 : i32, i32
  }
  func.func @transform_1(%arg0: i32) -> (i32, i32) {
    %c0_i32 = arith.constant 0 : i32
    %c0_i32_0 = arith.constant 0 : i32
    %c0_i32_1 = arith.constant 0 : i32
    return %c0_i32, %c0_i32_0 : i32, i32
  }
  func.func @transform_2(%arg0: i32) -> (i32, i32) {
    %c0_i32 = arith.constant 0 : i32
    %c0_i32_0 = arith.constant 0 : i32
    %c0_i32_1 = arith.constant 0 : i32
    return %c0_i32, %c0_i32_0 : i32, i32
  }
  func.func @transform_3(%arg0: i32) -> (i32, i32) {
    %c0_i32 = arith.constant 0 : i32
    %c0_i32_0 = arith.constant 0 : i32
    %c0_i32_1 = arith.constant 0 : i32
    return %c0_i32, %c0_i32_0 : i32, i32
  }
  func.func @transform_4(%arg0: i32) -> (i32, i32) {
    %c0_i32 = arith.constant 0 : i32
    %c0_i32_0 = arith.constant 0 : i32
    %c0_i32_1 = arith.constant 0 : i32
    return %c0_i32, %c0_i32_0 : i32, i32
  }
  func.func @transform_5(%arg0: i32) -> (i32, i32) {
    %c0_i32 = arith.constant 0 : i32
    %c0_i32_0 = arith.constant 0 : i32
    return %c0_i32, %arg0 : i32, i32
  }
  func.func @transform_6(%arg0: i32) -> (i32, i32) {
    %c0_i32 = arith.constant 0 : i32
    %c0_i32_0 = arith.constant 0 : i32
    return %c0_i32, %arg0 : i32, i32
  }
}

</mosaic_0001>

<llo_original>
// kernel: gflownet_forward.1
$region0: #{gflownet_forward.1}
  #allocation0 [shape = 'u32[]', space=smem, size = 0x4, offset = 0x4, fixed_abs, tag = 'smem constant byte address 0x4 - core index']
  #allocation1 [shape = 'u32[72,128]{1,0:T(1,128)}', space=vmem, size = 0x9000, scoped, tag = 'internal scratch']
  %s0 = inlined_call_operand.vmem [shape: f32[8,2], index: 0, kind: input, shape index: {}]
  %s1 = inlined_call_operand.vmem [shape: f32[2,128], index: 1, kind: input, shape index: {}]
  %s2 = inlined_call_operand.vmem [shape: f32[1,128], index: 2, kind: input, shape index: {}]
  %s3 = inlined_call_operand.vmem [shape: f32[8,128], index: 3, kind: input, shape index: {}]
  %s4 = inlined_call_operand.vmem [shape: f32[8,1], index: 4, kind: input, shape index: {}]
  %s5 = inlined_call_operand.hbm [shape: f32[4,8], index: 5, kind: output, shape index: {0}]
  %s6 = inlined_call_operand.hbm [shape: f32[1,8], index: 6, kind: output, shape index: {1}]
  %7 = xla_tuple %s5, %s6
  %s8 = sld [smem:[#allocation0]]
  $region38: #{gflownet_forward.1} parent=0
    _
  %s10 = ssub.s32 1, %s8
  %s11 = scalar_select 0, %s10, %s8
  $region1: #{gflownet_forward.1} parent=0
    #allocation2 [shape = 'u8[2048]{0}', space=vmem, size = 0x800, scoped, tag = 'output window, operand 0, single buffered']
    #allocation3 [shape = 's32[1]{0}', space=sflag, size = 0x4, scoped, tag = 'scoped memory for gflownet_forward.1']
    #allocation4 [shape = 'u8[512]{0}', space=vmem, size = 0x400, scoped, tag = 'output window, operand 1, single buffered']
    #allocation5 [shape = 's32[1]{0}', space=sflag, size = 0x4, scoped, tag = 'scoped memory for gflownet_forward.1']
    %12 = vsyncpa [#allocation3], 0
    %13 = vsyncpa [#allocation5], 0
    // Predicated region
    $region2: #{gflownet_forward.1} parent=1 // pred_check
      _
    $region3: #{gflownet_forward.1} parent=1 // pred_check_branch
      %15 = sbr.rel (0) target = $region5
    $region4: #{gflownet_forward.1} parent=1 // pred_region
      _
    $region5: #{gflownet_forward.1} parent=1 // pred_fallthru
      _
    // Predicated region
    $region6: #{gflownet_forward.1} parent=1 // pred_check
      _
    $region7: #{gflownet_forward.1} parent=1 // pred_check_branch
      %17 = sbr.rel (0) target = $region9
    $region8: #{gflownet_forward.1} parent=1 // pred_region
      _
    $region9: #{gflownet_forward.1} parent=1 // pred_fallthru
      _
    // Predicated region
    $region10: #{gflownet_forward.1} parent=1 // pred_check
      _
    $region11: #{gflownet_forward.1} parent=1 // pred_check_branch
      %19 = sbr.rel (0) target = $region13
    $region12: #{gflownet_forward.1} parent=1 // pred_region
      _
    $region13: #{gflownet_forward.1} parent=1 // pred_fallthru
      _
    // Predicated region
    $region14: #{gflownet_forward.1} parent=1 // pred_check
      _
    $region15: #{gflownet_forward.1} parent=1 // pred_check_branch
      %21 = sbr.rel (0) target = $region17
    $region16: #{gflownet_forward.1} parent=1 // pred_region
      _
    $region17: #{gflownet_forward.1} parent=1 // pred_fallthru
      _
    // Predicated region
    $region18: #{gflownet_forward.1} parent=1 // pred_check
      _
    $region19: #{gflownet_forward.1} parent=1 // pred_check_branch
      %23 = sbr.rel (0) target = $region21
    $region20: #{gflownet_forward.1} parent=1 // pred_region
      _
    $region21: #{gflownet_forward.1} parent=1 // pred_fallthru
      _
    %v24 = vld [vmem:[%s0] sm:$0xff]
    %v25 = vld [vmem:[%s0 + $0x8] sm:$0xff]
    %v26 = vld [vmem:[%s0 + $0x10] sm:$0xff]
    %v27 = vld [vmem:[%s0 + $0x18] sm:$0xff]
    %v28 = vld [vmem:[%s0 + $0x20] sm:$0xff]
    %v29 = vld [vmem:[%s0 + $0x28] sm:$0xff]
    %v30 = vld [vmem:[%s0 + $0x30] sm:$0xff]
    %v31 = vld [vmem:[%s0 + $0x38] sm:$0xff]
    %v32 = vld [vmem:[%s0 + $0x40] sm:$0xff]
    %v33 = vld [vmem:[%s0 + $0x48] sm:$0xff]
    %v34 = vld [vmem:[%s0 + $0x50] sm:$0xff]
    %v35 = vld [vmem:[%s0 + $0x58] sm:$0xff]
    %v36 = vld [vmem:[%s0 + $0x60] sm:$0xff]
    %v37 = vld [vmem:[%s0 + $0x68] sm:$0xff]
    %v38 = vld [vmem:[%s0 + $0x70] sm:$0xff]
    %v39 = vld [vmem:[%s0 + $0x78] sm:$0xff]
    %v40 = vld [vmem:[%s1] sm:$0x3]
    %v41 = vld [vmem:[%s2] sm:$0x1]
    %v43 = vperm.slane %v41, 0
    %vm45 = vcmask 15360
    %v47 = vsel %vm45, %v24, 0
    %v50 = vsel %vm45, %v25, 0
    %v53 = vsel %vm45, %v26, 0
    %v56 = vsel %vm45, %v27, 0
    %v59 = vsel %vm45, %v28, 0
    %v62 = vsel %vm45, %v29, 0
    %v65 = vsel %vm45, %v30, 0
    %v68 = vsel %vm45, %v31, 0
    %v71 = vsel %vm45, %v32, 0
    %v74 = vsel %vm45, %v33, 0
    %v77 = vsel %vm45, %v34, 0
    %v80 = vsel %vm45, %v35, 0
    %v83 = vsel %vm45, %v36, 0
    %v86 = vsel %vm45, %v37, 0
    %v89 = vsel %vm45, %v38, 0
    %v92 = vsel %vm45, %v39, 0
    %vm94 = vcmask 1041408
    %v96 = vsel %vm94, %v40, 0
    %98 = vmatpush.msra.mxu0 0.0
    %99 = vmatpush.msra.mxu0 0.0
    %100 = vmatpush.msra.mxu0 0.0
    %101 = vmatpush.msra.mxu0 0.0
    %102 = vmatpush.msra.mxu0 0.0
    %103 = vmatpush.msra.mxu0 0.0
    %104 = vmatpush.msra.mxu0 0.0
    %105 = vmatpush.msra.mxu0 0.0
    %106 = vmatpush.msra.mxu0 0.0
    %107 = vmatpush.msra.mxu0 0.0
    %108 = vmatpush.msra.mxu0 0.0
    %109 = vmatpush.msra.mxu0 0.0
    %110 = vmatpush.msra.mxu0 0.0
    %111 = vmatpush.msra.mxu0 0.0
    %112 = vmatpush.msra.mxu0 0.0
    %v113 = vand.u32 %v96, 4294901760
    %114 = vmatpush.msra.mxu0 %v113
    %v115 = vand.u32 %v47, 4294901760
    %v116 = vsub.f32 %v47, %v115
    %v117 = vand.u32 %v116, 4294901760
    %v118 = vsub.f32 %v116, %v117
    %v119 = vand.u32 %v118, 4294901760
    %120 = vmatmul.f32.gmra.mxu0 %v119
    %v121 = vpop.f32.mrf.mxu0
    %v122 = vadd.f32 %v43, %v121
    %v123 = vand.u32 %v50, 4294901760
    %v124 = vsub.f32 %v50, %v123
    %v125 = vand.u32 %v124, 4294901760
    %v126 = vsub.f32 %v124, %v125
    %v127 = vand.u32 %v126, 4294901760
    %128 = vmatmul.f32.gmra.mxu0 %v127
    %v129 = vpop.f32.mrf.mxu0
    %v130 = vadd.f32 %v43, %v129
    %v131 = vand.u32 %v53, 4294901760
    %v132 = vsub.f32 %v53, %v131
    %v133 = vand.u32 %v132, 4294901760
    %v134 = vsub.f32 %v132, %v133
    %v135 = vand.u32 %v134, 4294901760
    %136 = vmatmul.f32.gmra.mxu0 %v135
    %v137 = vpop.f32.mrf.mxu0
    %v138 = vadd.f32 %v43, %v137
    %v139 = vand.u32 %v56, 4294901760
    %v140 = vsub.f32 %v56, %v139
    %v141 = vand.u32 %v140, 4294901760
    %v142 = vsub.f32 %v140, %v141
    %v143 = vand.u32 %v142, 4294901760
    %144 = vmatmul.f32.gmra.mxu0 %v143
    %v145 = vpop.f32.mrf.mxu0
    %v146 = vadd.f32 %v43, %v145
    %v147 = vand.u32 %v59, 4294901760
    %v148 = vsub.f32 %v59, %v147
    %v149 = vand.u32 %v148, 4294901760
    %v150 = vsub.f32 %v148, %v149
    %v151 = vand.u32 %v150, 4294901760
    %152 = vmatmul.f32.gmra.mxu0 %v151
    %v153 = vpop.f32.mrf.mxu0
    %v154 = vadd.f32 %v43, %v153
    %v155 = vand.u32 %v62, 4294901760
    %v156 = vsub.f32 %v62, %v155
    %v157 = vand.u32 %v156, 4294901760
    %v158 = vsub.f32 %v156, %v157
    %v159 = vand.u32 %v158, 4294901760
    %160 = vmatmul.f32.gmra.mxu0 %v159
    %v161 = vpop.f32.mrf.mxu0
    %v162 = vadd.f32 %v43, %v161
    %v163 = vand.u32 %v65, 4294901760
    %v164 = vsub.f32 %v65, %v163
    %v165 = vand.u32 %v164, 4294901760
    %v166 = vsub.f32 %v164, %v165
    %v167 = vand.u32 %v166, 4294901760
    %168 = vmatmul.f32.gmra.mxu0 %v167
    %v169 = vpop.f32.mrf.mxu0
    %v170 = vadd.f32 %v43, %v169
    %v171 = vand.u32 %v68, 4294901760
    %v172 = vsub.f32 %v68, %v171
    %v173 = vand.u32 %v172, 4294901760
    %v174 = vsub.f32 %v172, %v173
    %v175 = vand.u32 %v174, 4294901760
    %176 = vmatmul.f32.gmra.mxu0 %v175
    %v177 = vpop.f32.mrf.mxu0
    %v178 = vadd.f32 %v43, %v177
    %v179 = vand.u32 %v71, 4294901760
    %v180 = vsub.f32 %v71, %v179
    %v181 = vand.u32 %v180, 4294901760
    %v182 = vsub.f32 %v180, %v181
    %v183 = vand.u32 %v182, 4294901760
    %184 = vmatmul.f32.gmra.mxu0 %v183
    %v185 = vpop.f32.mrf.mxu0
    %v186 = vadd.f32 %v43, %v185
    %v187 = vand.u32 %v74, 4294901760
    %v188 = vsub.f32 %v74, %v187
    %v189 = vand.u32 %v188, 4294901760
    %v190 = vsub.f32 %v188, %v189
    %v191 = vand.u32 %v190, 4294901760
    %192 = vmatmul.f32.gmra.mxu0 %v191
    %v193 = vpop.f32.mrf.mxu0
    %v194 = vadd.f32 %v43, %v193
    %v195 = vand.u32 %v77, 4294901760
    %v196 = vsub.f32 %v77, %v195
    %v197 = vand.u32 %v196, 4294901760
    %v198 = vsub.f32 %v196, %v197
    %v199 = vand.u32 %v198, 4294901760
    %200 = vmatmul.f32.gmra.mxu0 %v199
    %v201 = vpop.f32.mrf.mxu0
    %v202 = vadd.f32 %v43, %v201
    %v203 = vand.u32 %v80, 4294901760
    %v204 = vsub.f32 %v80, %v203
    %v205 = vand.u32 %v204, 4294901760
    %v206 = vsub.f32 %v204, %v205
    %v207 = vand.u32 %v206, 4294901760
    %208 = vmatmul.f32.gmra.mxu0 %v207
    %v209 = vpop.f32.mrf.mxu0
    %v210 = vadd.f32 %v43, %v209
    %v211 = vand.u32 %v83, 4294901760
    %v212 = vsub.f32 %v83, %v211
    %v213 = vand.u32 %v212, 4294901760
    %v214 = vsub.f32 %v212, %v213
    %v215 = vand.u32 %v214, 4294901760
    %216 = vmatmul.f32.gmra.mxu0 %v215
    %v217 = vpop.f32.mrf.mxu0
    %v218 = vadd.f32 %v43, %v217
    %v219 = vand.u32 %v86, 4294901760
    %v220 = vsub.f32 %v86, %v219
    %v221 = vand.u32 %v220, 4294901760
    %v222 = vsub.f32 %v220, %v221
    %v223 = vand.u32 %v222, 4294901760
    %224 = vmatmul.f32.gmra.mxu0 %v223
    %v225 = vpop.f32.mrf.mxu0
    %v226 = vadd.f32 %v43, %v225
    %v227 = vand.u32 %v89, 4294901760
    %v228 = vsub.f32 %v89, %v227
    %v229 = vand.u32 %v228, 4294901760
    %v230 = vsub.f32 %v228, %v229
    %v231 = vand.u32 %v230, 4294901760
    %232 = vmatmul.f32.gmra.mxu0 %v231
    %v233 = vpop.f32.mrf.mxu0
    %v234 = vadd.f32 %v43, %v233
    %v235 = vand.u32 %v92, 4294901760
    %v236 = vsub.f32 %v92, %v235
    %v237 = vand.u32 %v236, 4294901760
    %v238 = vsub.f32 %v236, %v237
    %v239 = vand.u32 %v238, 4294901760
    %240 = vmatmul.f32.gmra.mxu0 %v239
    %v241 = vpop.f32.mrf.mxu0
    %v242 = vadd.f32 %v43, %v241
    %243 = vdwg.mxu0
    %244 = vmatpush.msra.mxu0 0.0
    %245 = vmatpush.msra.mxu0 0.0
    %246 = vmatpush.msra.mxu0 0.0
    %247 = vmatpush.msra.mxu0 0.0
    %248 = vmatpush.msra.mxu0 0.0
    %249 = vmatpush.msra.mxu0 0.0
    %250 = vmatpush.msra.mxu0 0.0
    %251 = vmatpush.msra.mxu0 0.0
    %252 = vmatpush.msra.mxu0 0.0
    %253 = vmatpush.msra.mxu0 0.0
    %254 = vmatpush.msra.mxu0 0.0
    %255 = vmatpush.msra.mxu0 0.0
    %256 = vmatpush.msra.mxu0 0.0
    %257 = vmatpush.msra.mxu0 0.0
    %258 = vmatpush.msra.mxu0 0.0
    %v259 = vand.u32 %v96, 4294901760
    %v260 = vsub.f32 %v96, %v259
    %v261 = vand.u32 %v260, 4294901760
    %v262 = vsub.f32 %v260, %v261
    %v263 = vand.u32 %v262, 4294901760
    %264 = vmatpush.msra.mxu0 %v263
    %v265 = vand.u32 %v47, 4294901760
    %266 = vmatmul.f32.gmra.mxu0 %v265
    %v267 = vpop.f32.mrf.mxu0
    %v268 = vadd.f32 %v122, %v267
    %v269 = vand.u32 %v50, 4294901760
    %270 = vmatmul.f32.gmra.mxu0 %v269
    %v271 = vpop.f32.mrf.mxu0
    %v272 = vadd.f32 %v130, %v271
    %v273 = vand.u32 %v53, 4294901760
    %274 = vmatmul.f32.gmra.mxu0 %v273
    %v275 = vpop.f32.mrf.mxu0
    %v276 = vadd.f32 %v138, %v275
    %v277 = vand.u32 %v56, 4294901760
    %278 = vmatmul.f32.gmra.mxu0 %v277
    %v279 = vpop.f32.mrf.mxu0
    %v280 = vadd.f32 %v146, %v279
    %v281 = vand.u32 %v59, 4294901760
    %282 = vmatmul.f32.gmra.mxu0 %v281
    %v283 = vpop.f32.mrf.mxu0
    %v284 = vadd.f32 %v154, %v283
    %v285 = vand.u32 %v62, 4294901760
    %286 = vmatmul.f32.gmra.mxu0 %v285
    %v287 = vpop.f32.mrf.mxu0
    %v288 = vadd.f32 %v162, %v287
    %v289 = vand.u32 %v65, 4294901760
    %290 = vmatmul.f32.gmra.mxu0 %v289
    %v291 = vpop.f32.mrf.mxu0
    %v292 = vadd.f32 %v170, %v291
    %v293 = vand.u32 %v68, 4294901760
    %294 = vmatmul.f32.gmra.mxu0 %v293
    %v295 = vpop.f32.mrf.mxu0
    %v296 = vadd.f32 %v178, %v295
    %v297 = vand.u32 %v71, 4294901760
    %298 = vmatmul.f32.gmra.mxu0 %v297
    %v299 = vpop.f32.mrf.mxu0
    %v300 = vadd.f32 %v186, %v299
    %v301 = vand.u32 %v74, 4294901760
    %302 = vmatmul.f32.gmra.mxu0 %v301
    %v303 = vpop.f32.mrf.mxu0
    %v304 = vadd.f32 %v194, %v303
    %v305 = vand.u32 %v77, 4294901760
    %306 = vmatmul.f32.gmra.mxu0 %v305
    %v307 = vpop.f32.mrf.mxu0
    %v308 = vadd.f32 %v202, %v307
    %v309 = vand.u32 %v80, 4294901760
    %310 = vmatmul.f32.gmra.mxu0 %v309
    %v311 = vpop.f32.mrf.mxu0
    %v312 = vadd.f32 %v210, %v311
    %v313 = vand.u32 %v83, 4294901760
    %314 = vmatmul.f32.gmra.mxu0 %v313
    %v315 = vpop.f32.mrf.mxu0
    %v316 = vadd.f32 %v218, %v315
    %v317 = vand.u32 %v86, 4294901760
    %318 = vmatmul.f32.gmra.mxu0 %v317
    %v319 = vpop.f32.mrf.mxu0
    %v320 = vadd.f32 %v226, %v319
    %v321 = vand.u32 %v89, 4294901760
    %322 = vmatmul.f32.gmra.mxu0 %v321
    %v323 = vpop.f32.mrf.mxu0
    %v324 = vadd.f32 %v234, %v323
    %v325 = vand.u32 %v92, 4294901760
    %326 = vmatmul.f32.gmra.mxu0 %v325
    %v327 = vpop.f32.mrf.mxu0
    %v328 = vadd.f32 %v242, %v327
    %329 = vdwg.mxu0
    %330 = vmatpush.msra.mxu0 0.0
    %331 = vmatpush.msra.mxu0 0.0
    %332 = vmatpush.msra.mxu0 0.0
    %333 = vmatpush.msra.mxu0 0.0
    %334 = vmatpush.msra.mxu0 0.0
    %335 = vmatpush.msra.mxu0 0.0
    %336 = vmatpush.msra.mxu0 0.0
    %337 = vmatpush.msra.mxu0 0.0
    %338 = vmatpush.msra.mxu0 0.0
    %339 = vmatpush.msra.mxu0 0.0
    %340 = vmatpush.msra.mxu0 0.0
    %341 = vmatpush.msra.mxu0 0.0
    %342 = vmatpush.msra.mxu0 0.0
    %343 = vmatpush.msra.mxu0 0.0
    %344 = vmatpush.msra.mxu0 0.0
    %v345 = vand.u32 %v96, 4294901760
    %v346 = vsub.f32 %v96, %v345
    %347 = vmatpush.msra.mxu0 %v346
    %v348 = vand.u32 %v47, 4294901760
    %v349 = vsub.f32 %v47, %v348
    %350 = vmatmul.f32.gmra.mxu0 %v349
    %v351 = vpop.f32.mrf.mxu0
    %v352 = vadd.f32 %v268, %v351
    %v353 = vand.u32 %v50, 4294901760
    %v354 = vsub.f32 %v50, %v353
    %355 = vmatmul.f32.gmra.mxu0 %v354
    %v356 = vpop.f32.mrf.mxu0
    %v357 = vadd.f32 %v272, %v356
    %v358 = vand.u32 %v53, 4294901760
    %v359 = vsub.f32 %v53, %v358
    %360 = vmatmul.f32.gmra.mxu0 %v359
    %v361 = vpop.f32.mrf.mxu0
    %v362 = vadd.f32 %v276, %v361
    %v363 = vand.u32 %v56, 4294901760
    %v364 = vsub.f32 %v56, %v363
    %365 = vmatmul.f32.gmra.mxu0 %v364
    %v366 = vpop.f32.mrf.mxu0
    %v367 = vadd.f32 %v280, %v366
    %v368 = vand.u32 %v59, 4294901760
    %v369 = vsub.f32 %v59, %v368
    %370 = vmatmul.f32.gmra.mxu0 %v369
    %v371 = vpop.f32.mrf.mxu0
    %v372 = vadd.f32 %v284, %v371
    %v373 = vand.u32 %v62, 4294901760
    %v374 = vsub.f32 %v62, %v373
    %375 = vmatmul.f32.gmra.mxu0 %v374
    %v376 = vpop.f32.mrf.mxu0
    %v377 = vadd.f32 %v288, %v376
    %v378 = vand.u32 %v65, 4294901760
    %v379 = vsub.f32 %v65, %v378
    %380 = vmatmul.f32.gmra.mxu0 %v379
    %v381 = vpop.f32.mrf.mxu0
    %v382 = vadd.f32 %v292, %v381
    %v383 = vand.u32 %v68, 4294901760
    %v384 = vsub.f32 %v68, %v383
    %385 = vmatmul.f32.gmra.mxu0 %v384
    %v386 = vpop.f32.mrf.mxu0
    %v387 = vadd.f32 %v296, %v386
    %v388 = vand.u32 %v71, 4294901760
    %v389 = vsub.f32 %v71, %v388
    %390 = vmatmul.f32.gmra.mxu0 %v389
    %v391 = vpop.f32.mrf.mxu0
    %v392 = vadd.f32 %v300, %v391
    %v393 = vand.u32 %v74, 4294901760
    %v394 = vsub.f32 %v74, %v393
    %395 = vmatmul.f32.gmra.mxu0 %v394
    %v396 = vpop.f32.mrf.mxu0
    %v397 = vadd.f32 %v304, %v396
    %v398 = vand.u32 %v77, 4294901760
    %v399 = vsub.f32 %v77, %v398
    %400 = vmatmul.f32.gmra.mxu0 %v399
    %v401 = vpop.f32.mrf.mxu0
    %v402 = vadd.f32 %v308, %v401
    %v403 = vand.u32 %v80, 4294901760
    %v404 = vsub.f32 %v80, %v403
    %405 = vmatmul.f32.gmra.mxu0 %v404
    %v406 = vpop.f32.mrf.mxu0
    %v407 = vadd.f32 %v312, %v406
    %v408 = vand.u32 %v83, 4294901760
    %v409 = vsub.f32 %v83, %v408
    %410 = vmatmul.f32.gmra.mxu0 %v409
    %v411 = vpop.f32.mrf.mxu0
    %v412 = vadd.f32 %v316, %v411
    %v413 = vand.u32 %v86, 4294901760
    %v414 = vsub.f32 %v86, %v413
    %415 = vmatmul.f32.gmra.mxu0 %v414
    %v416 = vpop.f32.mrf.mxu0
    %v417 = vadd.f32 %v320, %v416
    %v418 = vand.u32 %v89, 4294901760
    %v419 = vsub.f32 %v89, %v418
    %420 = vmatmul.f32.gmra.mxu0 %v419
    %v421 = vpop.f32.mrf.mxu0
    %v422 = vadd.f32 %v324, %v421
    %v423 = vand.u32 %v92, 4294901760
    %v424 = vsub.f32 %v92, %v423
    %425 = vmatmul.f32.gmra.mxu0 %v424
    %v426 = vpop.f32.mrf.mxu0
    %v427 = vadd.f32 %v328, %v426
    %428 = vdwg.mxu0
    %429 = vmatpush.msra.mxu0 0.0
    %430 = vmatpush.msra.mxu0 0.0
    %431 = vmatpush.msra.mxu0 0.0
    %432 = vmatpush.msra.mxu0 0.0
    %433 = vmatpush.msra.mxu0 0.0
    %434 = vmatpush.msra.mxu0 0.0
    %435 = vmatpush.msra.mxu0 0.0
    %436 = vmatpush.msra.mxu0 0.0
    %437 = vmatpush.msra.mxu0 0.0
    %438 = vmatpush.msra.mxu0 0.0
    %439 = vmatpush.msra.mxu0 0.0
    %440 = vmatpush.msra.mxu0 0.0
    %441 = vmatpush.msra.mxu0 0.0
    %442 = vmatpush.msra.mxu0 0.0
    %443 = vmatpush.msra.mxu0 0.0
    %v444 = vand.u32 %v96, 4294901760
    %445 = vmatpush.msra.mxu0 %v444
    %v446 = vand.u32 %v47, 4294901760
    %v447 = vsub.f32 %v47, %v446
    %v448 = vand.u32 %v447, 4294901760
    %449 = vmatmul.f32.gmra.mxu0 %v448
    %v450 = vpop.f32.mrf.mxu0
    %v451 = vadd.f32 %v352, %v450
    %v452 = vand.u32 %v50, 4294901760
    %v453 = vsub.f32 %v50, %v452
    %v454 = vand.u32 %v453, 4294901760
    %455 = vmatmul.f32.gmra.mxu0 %v454
    %v456 = vpop.f32.mrf.mxu0
    %v457 = vadd.f32 %v357, %v456
    %v458 = vand.u32 %v53, 4294901760
    %v459 = vsub.f32 %v53, %v458
    %v460 = vand.u32 %v459, 4294901760
    %461 = vmatmul.f32.gmra.mxu0 %v460
    %v462 = vpop.f32.mrf.mxu0
    %v463 = vadd.f32 %v362, %v462
    %v464 = vand.u32 %v56, 4294901760
    %v465 = vsub.f32 %v56, %v464
    %v466 = vand.u32 %v465, 4294901760
    %467 = vmatmul.f32.gmra.mxu0 %v466
    %v468 = vpop.f32.mrf.mxu0
    %v469 = vadd.f32 %v367, %v468
    %v470 = vand.u32 %v59, 4294901760
    %v471 = vsub.f32 %v59, %v470
    %v472 = vand.u32 %v471, 4294901760
    %473 = vmatmul.f32.gmra.mxu0 %v472
    %v474 = vpop.f32.mrf.mxu0
    %v475 = vadd.f32 %v372, %v474
    %v476 = vand.u32 %v62, 4294901760
    %v477 = vsub.f32 %v62, %v476
    %v478 = vand.u32 %v477, 4294901760
    %479 = vmatmul.f32.gmra.mxu0 %v478
    %v480 = vpop.f32.mrf.mxu0
    %v481 = vadd.f32 %v377, %v480
    %v482 = vand.u32 %v65, 4294901760
    %v483 = vsub.f32 %v65, %v482
    %v484 = vand.u32 %v483, 4294901760
    %485 = vmatmul.f32.gmra.mxu0 %v484
    %v486 = vpop.f32.mrf.mxu0
    %v487 = vadd.f32 %v382, %v486
    %v488 = vand.u32 %v68, 4294901760
    %v489 = vsub.f32 %v68, %v488
    %v490 = vand.u32 %v489, 4294901760
    %491 = vmatmul.f32.gmra.mxu0 %v490
    %v492 = vpop.f32.mrf.mxu0
    %v493 = vadd.f32 %v387, %v492
    %v494 = vand.u32 %v71, 4294901760
    %v495 = vsub.f32 %v71, %v494
    %v496 = vand.u32 %v495, 4294901760
    %497 = vmatmul.f32.gmra.mxu0 %v496
    %v498 = vpop.f32.mrf.mxu0
    %v499 = vadd.f32 %v392, %v498
    %v500 = vand.u32 %v74, 4294901760
    %v501 = vsub.f32 %v74, %v500
    %v502 = vand.u32 %v501, 4294901760
    %503 = vmatmul.f32.gmra.mxu0 %v502
    %v504 = vpop.f32.mrf.mxu0
    %v505 = vadd.f32 %v397, %v504
    %v506 = vand.u32 %v77, 4294901760
    %v507 = vsub.f32 %v77, %v506
    %v508 = vand.u32 %v507, 4294901760
    %509 = vmatmul.f32.gmra.mxu0 %v508
    %v510 = vpop.f32.mrf.mxu0
    %v511 = vadd.f32 %v402, %v510
    %v512 = vand.u32 %v80, 4294901760
    %v513 = vsub.f32 %v80, %v512
    %v514 = vand.u32 %v513, 4294901760
    %515 = vmatmul.f32.gmra.mxu0 %v514
    %v516 = vpop.f32.mrf.mxu0
    %v517 = vadd.f32 %v407, %v516
    %v518 = vand.u32 %v83, 4294901760
    %v519 = vsub.f32 %v83, %v518
    %v520 = vand.u32 %v519, 4294901760
    %521 = vmatmul.f32.gmra.mxu0 %v520
    %v522 = vpop.f32.mrf.mxu0
    %v523 = vadd.f32 %v412, %v522
    %v524 = vand.u32 %v86, 4294901760
    %v525 = vsub.f32 %v86, %v524
    %v526 = vand.u32 %v525, 4294901760
    %527 = vmatmul.f32.gmra.mxu0 %v526
    %v528 = vpop.f32.mrf.mxu0
    %v529 = vadd.f32 %v417, %v528
    %v530 = vand.u32 %v89, 4294901760
    %v531 = vsub.f32 %v89, %v530
    %v532 = vand.u32 %v531, 4294901760
    %533 = vmatmul.f32.gmra.mxu0 %v532
    %v534 = vpop.f32.mrf.mxu0
    %v535 = vadd.f32 %v422, %v534
    %v536 = vand.u32 %v92, 4294901760
    %v537 = vsub.f32 %v92, %v536
    %v538 = vand.u32 %v537, 4294901760
    %539 = vmatmul.f32.gmra.mxu0 %v538
    %v540 = vpop.f32.mrf.mxu0
    %v541 = vadd.f32 %v427, %v540
    %542 = vdwg.mxu0
    %543 = vmatpush.msra.mxu0 0.0
    %544 = vmatpush.msra.mxu0 0.0
    %545 = vmatpush.msra.mxu0 0.0
    %546 = vmatpush.msra.mxu0 0.0
    %547 = vmatpush.msra.mxu0 0.0
    %548 = vmatpush.msra.mxu0 0.0
    %549 = vmatpush.msra.mxu0 0.0
    %550 = vmatpush.msra.mxu0 0.0
    %551 = vmatpush.msra.mxu0 0.0
    %552 = vmatpush.msra.mxu0 0.0
    %553 = vmatpush.msra.mxu0 0.0
    %554 = vmatpush.msra.mxu0 0.0
    %555 = vmatpush.msra.mxu0 0.0
    %556 = vmatpush.msra.mxu0 0.0
    %557 = vmatpush.msra.mxu0 0.0
    %v558 = vand.u32 %v96, 4294901760
    %v559 = vsub.f32 %v96, %v558
    %v560 = vand.u32 %v559, 4294901760
    %561 = vmatpush.msra.mxu0 %v560
    %v562 = vand.u32 %v47, 4294901760
    %563 = vmatmul.f32.gmra.mxu0 %v562
    %v564 = vpop.f32.mrf.mxu0
    %v565 = vadd.f32 %v451, %v564
    %v566 = vand.u32 %v50, 4294901760
    %567 = vmatmul.f32.gmra.mxu0 %v566
    %v568 = vpop.f32.mrf.mxu0
    %v569 = vadd.f32 %v457, %v568
    %v570 = vand.u32 %v53, 4294901760
    %571 = vmatmul.f32.gmra.mxu0 %v570
    %v572 = vpop.f32.mrf.mxu0
    %v573 = vadd.f32 %v463, %v572
    %v574 = vand.u32 %v56, 4294901760
    %575 = vmatmul.f32.gmra.mxu0 %v574
    %v576 = vpop.f32.mrf.mxu0
    %v577 = vadd.f32 %v469, %v576
    %v578 = vand.u32 %v59, 4294901760
    %579 = vmatmul.f32.gmra.mxu0 %v578
    %v580 = vpop.f32.mrf.mxu0
    %v581 = vadd.f32 %v475, %v580
    %v582 = vand.u32 %v62, 4294901760
    %583 = vmatmul.f32.gmra.mxu0 %v582
    %v584 = vpop.f32.mrf.mxu0
    %v585 = vadd.f32 %v481, %v584
    %v586 = vand.u32 %v65, 4294901760
    %587 = vmatmul.f32.gmra.mxu0 %v586
    %v588 = vpop.f32.mrf.mxu0
    %v589 = vadd.f32 %v487, %v588
    %v590 = vand.u32 %v68, 4294901760
    %591 = vmatmul.f32.gmra.mxu0 %v590
    %v592 = vpop.f32.mrf.mxu0
    %v593 = vadd.f32 %v493, %v592
    %v594 = vand.u32 %v71, 4294901760
    %595 = vmatmul.f32.gmra.mxu0 %v594
    %v596 = vpop.f32.mrf.mxu0
    %v597 = vadd.f32 %v499, %v596
    %v598 = vand.u32 %v74, 4294901760
    %599 = vmatmul.f32.gmra.mxu0 %v598
    %v600 = vpop.f32.mrf.mxu0
    %v601 = vadd.f32 %v505, %v600
    %v602 = vand.u32 %v77, 4294901760
    %603 = vmatmul.f32.gmra.mxu0 %v602
    %v604 = vpop.f32.mrf.mxu0
    %v605 = vadd.f32 %v511, %v604
    %v606 = vand.u32 %v80, 4294901760
    %607 = vmatmul.f32.gmra.mxu0 %v606
    %v608 = vpop.f32.mrf.mxu0
    %v609 = vadd.f32 %v517, %v608
    %v610 = vand.u32 %v83, 4294901760
    %611 = vmatmul.f32.gmra.mxu0 %v610
    %v612 = vpop.f32.mrf.mxu0
    %v613 = vadd.f32 %v523, %v612
    %v614 = vand.u32 %v86, 4294901760
    %615 = vmatmul.f32.gmra.mxu0 %v614
    %v616 = vpop.f32.mrf.mxu0
    %v617 = vadd.f32 %v529, %v616
    %v618 = vand.u32 %v89, 4294901760
    %619 = vmatmul.f32.gmra.mxu0 %v618
    %v620 = vpop.f32.mrf.mxu0
    %v621 = vadd.f32 %v535, %v620
    %v622 = vand.u32 %v92, 4294901760
    %623 = vmatmul.f32.gmra.mxu0 %v622
    %v624 = vpop.f32.mrf.mxu0
    %v625 = vadd.f32 %v541, %v624
    %626 = vdwg.mxu0
    %627 = vmatpush.msra.mxu0 0.0
    %628 = vmatpush.msra.mxu0 0.0
    %629 = vmatpush.msra.mxu0 0.0
    %630 = vmatpush.msra.mxu0 0.0
    %631 = vmatpush.msra.mxu0 0.0
    %632 = vmatpush.msra.mxu0 0.0
    %633 = vmatpush.msra.mxu0 0.0
    %634 = vmatpush.msra.mxu0 0.0
    %635 = vmatpush.msra.mxu0 0.0
    %636 = vmatpush.msra.mxu0 0.0
    %637 = vmatpush.msra.mxu0 0.0
    %638 = vmatpush.msra.mxu0 0.0
    %639 = vmatpush.msra.mxu0 0.0
    %640 = vmatpush.msra.mxu0 0.0
    %641 = vmatpush.msra.mxu0 0.0
    %v642 = vand.u32 %v96, 4294901760
    %643 = vmatpush.msra.mxu0 %v642
    %v644 = vand.u32 %v47, 4294901760
    %645 = vmatmul.f32.gmra.mxu0 %v644
    %v646 = vpop.f32.mrf.mxu0
    %v647 = vadd.f32 %v565, %v646
    %v648 = vand.u32 %v50, 4294901760
    %649 = vmatmul.f32.gmra.mxu0 %v648
    %v650 = vpop.f32.mrf.mxu0
    %v651 = vadd.f32 %v569, %v650
    %v652 = vand.u32 %v53, 4294901760
    %653 = vmatmul.f32.gmra.mxu0 %v652
    %v654 = vpop.f32.mrf.mxu0
    %v655 = vadd.f32 %v573, %v654
    %v656 = vand.u32 %v56, 4294901760
    %657 = vmatmul.f32.gmra.mxu0 %v656
    %v658 = vpop.f32.mrf.mxu0
    %v659 = vadd.f32 %v577, %v658
    %v660 = vand.u32 %v59, 4294901760
    %661 = vmatmul.f32.gmra.mxu0 %v660
    %v662 = vpop.f32.mrf.mxu0
    %v663 = vadd.f32 %v581, %v662
    %v664 = vand.u32 %v62, 4294901760
    %665 = vmatmul.f32.gmra.mxu0 %v664
    %v666 = vpop.f32.mrf.mxu0
    %v667 = vadd.f32 %v585, %v666
    %v668 = vand.u32 %v65, 4294901760
    %669 = vmatmul.f32.gmra.mxu0 %v668
    %v670 = vpop.f32.mrf.mxu0
    %v671 = vadd.f32 %v589, %v670
    %v672 = vand.u32 %v68, 4294901760
    %673 = vmatmul.f32.gmra.mxu0 %v672
    %v674 = vpop.f32.mrf.mxu0
    %v675 = vadd.f32 %v593, %v674
    %v676 = vand.u32 %v71, 4294901760
    %677 = vmatmul.f32.gmra.mxu0 %v676
    %v678 = vpop.f32.mrf.mxu0
    %v679 = vadd.f32 %v597, %v678
    %v680 = vand.u32 %v74, 4294901760
    %681 = vmatmul.f32.gmra.mxu0 %v680
    %v682 = vpop.f32.mrf.mxu0
    %v683 = vadd.f32 %v601, %v682
    %v684 = vand.u32 %v77, 4294901760
    %685 = vmatmul.f32.gmra.mxu0 %v684
    %v686 = vpop.f32.mrf.mxu0
    %v687 = vadd.f32 %v605, %v686
    %v688 = vand.u32 %v80, 4294901760
    %689 = vmatmul.f32.gmra.mxu0 %v688
    %v690 = vpop.f32.mrf.mxu0
    %v691 = vadd.f32 %v609, %v690
    %v692 = vand.u32 %v83, 4294901760
    %693 = vmatmul.f32.gmra.mxu0 %v692
    %v694 = vpop.f32.mrf.mxu0
    %v695 = vadd.f32 %v613, %v694
    %v696 = vand.u32 %v86, 4294901760
    %697 = vmatmul.f32.gmra.mxu0 %v696
    %v698 = vpop.f32.mrf.mxu0
    %v699 = vadd.f32 %v617, %v698
    %v700 = vand.u32 %v89, 4294901760
    %701 = vmatmul.f32.gmra.mxu0 %v700
    %v702 = vpop.f32.mrf.mxu0
    %v703 = vadd.f32 %v621, %v702
    %v704 = vand.u32 %v92, 4294901760
    %705 = vmatmul.f32.gmra.mxu0 %v704
    %v706 = vpop.f32.mrf.mxu0
    %v707 = vadd.f32 %v625, %v706
    %708 = vdwg.mxu0
    %v709 = vmax.f32 %v647, 0.0
    %v710 = vmax.f32 %v651, 0.0
    %v711 = vmax.f32 %v655, 0.0
    %v712 = vmax.f32 %v659, 0.0
    %v713 = vmax.f32 %v663, 0.0
    %v714 = vmax.f32 %v667, 0.0
    %v715 = vmax.f32 %v671, 0.0
    %v716 = vmax.f32 %v675, 0.0
    %v717 = vmax.f32 %v679, 0.0
    %v718 = vmax.f32 %v683, 0.0
    %v719 = vmax.f32 %v687, 0.0
    %v720 = vmax.f32 %v691, 0.0
    %v721 = vmax.f32 %v695, 0.0
    %v722 = vmax.f32 %v699, 0.0
    %v723 = vmax.f32 %v703, 0.0
    %v724 = vmax.f32 %v707, 0.0
    %v725 = vld [vmem:[%s3] sm:$0xff]
    %v726 = vld [vmem:[%s4] sm:$0xff]
    %728 = vset.pattern.permute.xlu0 0
    %729 = vperm.xlu0 %728, %v726
    %v730 = vpop.permute.xlu0 %729
    %v732 = vand.u32 %v724, 4294901760
    %733 = vmatpush.xpose.msra.mxu0 %v732
    %v734 = vand.u32 %v723, 4294901760
    %735 = vmatpush.xpose.msra.mxu0 %v734
    %v736 = vand.u32 %v722, 4294901760
    %737 = vmatpush.xpose.msra.mxu0 %v736
    %v738 = vand.u32 %v721, 4294901760
    %739 = vmatpush.xpose.msra.mxu0 %v738
    %v740 = vand.u32 %v720, 4294901760
    %741 = vmatpush.xpose.msra.mxu0 %v740
    %v742 = vand.u32 %v719, 4294901760
    %743 = vmatpush.xpose.msra.mxu0 %v742
    %v744 = vand.u32 %v718, 4294901760
    %745 = vmatpush.xpose.msra.mxu0 %v744
    %v746 = vand.u32 %v717, 4294901760
    %747 = vmatpush.xpose.msra.mxu0 %v746
    %v748 = vand.u32 %v716, 4294901760
    %749 = vmatpush.xpose.msra.mxu0 %v748
    %v750 = vand.u32 %v715, 4294901760
    %751 = vmatpush.xpose.msra.mxu0 %v750
    %v752 = vand.u32 %v714, 4294901760
    %753 = vmatpush.xpose.msra.mxu0 %v752
    %v754 = vand.u32 %v713, 4294901760
    %755 = vmatpush.xpose.msra.mxu0 %v754
    %v756 = vand.u32 %v712, 4294901760
    %757 = vmatpush.xpose.msra.mxu0 %v756
    %v758 = vand.u32 %v711, 4294901760
    %759 = vmatpush.xpose.msra.mxu0 %v758
    %v760 = vand.u32 %v710, 4294901760
    %761 = vmatpush.xpose.msra.mxu0 %v760
    %v762 = vand.u32 %v709, 4294901760
    %763 = vmatpush.xpose.msra.mxu0 %v762
    %v764 = vand.u32 %v725, 4294901760
    %v765 = vsub.f32 %v725, %v764
    %v766 = vand.u32 %v765, 4294901760
    %v767 = vsub.f32 %v765, %v766
    %v768 = vand.u32 %v767, 4294901760
    %769 = vmatmul.f32.gmra.mxu0 %v768
    %v770 = vpop.f32.mrf.mxu0
    %v771 = vadd.f32 %v730, %v770
    %772 = vdwg.mxu0
    %v773 = vand.u32 %v724, 4294901760
    %v774 = vsub.f32 %v724, %v773
    %v775 = vand.u32 %v774, 4294901760
    %v776 = vsub.f32 %v774, %v775
    %v777 = vand.u32 %v776, 4294901760
    %778 = vmatpush.xpose.msra.mxu0 %v777
    %v779 = vand.u32 %v723, 4294901760
    %v780 = vsub.f32 %v723, %v779
    %v781 = vand.u32 %v780, 4294901760
    %v782 = vsub.f32 %v780, %v781
    %v783 = vand.u32 %v782, 4294901760
    %784 = vmatpush.xpose.msra.mxu0 %v783
    %v785 = vand.u32 %v722, 4294901760
    %v786 = vsub.f32 %v722, %v785
    %v787 = vand.u32 %v786, 4294901760
    %v788 = vsub.f32 %v786, %v787
    %v789 = vand.u32 %v788, 4294901760
    %790 = vmatpush.xpose.msra.mxu0 %v789
    %v791 = vand.u32 %v721, 4294901760
    %v792 = vsub.f32 %v721, %v791
    %v793 = vand.u32 %v792, 4294901760
    %v794 = vsub.f32 %v792, %v793
    %v795 = vand.u32 %v794, 4294901760
    %796 = vmatpush.xpose.msra.mxu0 %v795
    %v797 = vand.u32 %v720, 4294901760
    %v798 = vsub.f32 %v720, %v797
    %v799 = vand.u32 %v798, 4294901760
    %v800 = vsub.f32 %v798, %v799
    %v801 = vand.u32 %v800, 4294901760
    %802 = vmatpush.xpose.msra.mxu0 %v801
    %v803 = vand.u32 %v719, 4294901760
    %v804 = vsub.f32 %v719, %v803
    %v805 = vand.u32 %v804, 4294901760
    %v806 = vsub.f32 %v804, %v805
    %v807 = vand.u32 %v806, 4294901760
    %808 = vmatpush.xpose.msra.mxu0 %v807
    %v809 = vand.u32 %v718, 4294901760
    %v810 = vsub.f32 %v718, %v809
    %v811 = vand.u32 %v810, 4294901760
    %v812 = vsub.f32 %v810, %v811
    %v813 = vand.u32 %v812, 4294901760
    %814 = vmatpush.xpose.msra.mxu0 %v813
    %v815 = vand.u32 %v717, 4294901760
    %v816 = vsub.f32 %v717, %v815
    %v817 = vand.u32 %v816, 4294901760
    %v818 = vsub.f32 %v816, %v817
    %v819 = vand.u32 %v818, 4294901760
    %820 = vmatpush.xpose.msra.mxu0 %v819
    %v821 = vand.u32 %v716, 4294901760
    %v822 = vsub.f32 %v716, %v821
    %v823 = vand.u32 %v822, 4294901760
    %v824 = vsub.f32 %v822, %v823
    %v825 = vand.u32 %v824, 4294901760
    %826 = vmatpush.xpose.msra.mxu0 %v825
    %v827 = vand.u32 %v715, 4294901760
    %v828 = vsub.f32 %v715, %v827
    %v829 = vand.u32 %v828, 4294901760
    %v830 = vsub.f32 %v828, %v829
    %v831 = vand.u32 %v830, 4294901760
    %832 = vmatpush.xpose.msra.mxu0 %v831
    %v833 = vand.u32 %v714, 4294901760
    %v834 = vsub.f32 %v714, %v833
    %v835 = vand.u32 %v834, 4294901760
    %v836 = vsub.f32 %v834, %v835
    %v837 = vand.u32 %v836, 4294901760
    %838 = vmatpush.xpose.msra.mxu0 %v837
    %v839 = vand.u32 %v713, 4294901760
    %v840 = vsub.f32 %v713, %v839
    %v841 = vand.u32 %v840, 4294901760
    %v842 = vsub.f32 %v840, %v841
    %v843 = vand.u32 %v842, 4294901760
    %844 = vmatpush.xpose.msra.mxu0 %v843
    %v845 = vand.u32 %v712, 4294901760
    %v846 = vsub.f32 %v712, %v845
    %v847 = vand.u32 %v846, 4294901760
    %v848 = vsub.f32 %v846, %v847
    %v849 = vand.u32 %v848, 4294901760
    %850 = vmatpush.xpose.msra.mxu0 %v849
    %v851 = vand.u32 %v711, 4294901760
    %v852 = vsub.f32 %v711, %v851
    %v853 = vand.u32 %v852, 4294901760
    %v854 = vsub.f32 %v852, %v853
    %v855 = vand.u32 %v854, 4294901760
    %856 = vmatpush.xpose.msra.mxu0 %v855
    %v857 = vand.u32 %v710, 4294901760
    %v858 = vsub.f32 %v710, %v857
    %v859 = vand.u32 %v858, 4294901760
    %v860 = vsub.f32 %v858, %v859
    %v861 = vand.u32 %v860, 4294901760
    %862 = vmatpush.xpose.msra.mxu0 %v861
    %v863 = vand.u32 %v709, 4294901760
    %v864 = vsub.f32 %v709, %v863
    %v865 = vand.u32 %v864, 4294901760
    %v866 = vsub.f32 %v864, %v865
    %v867 = vand.u32 %v866, 4294901760
    %868 = vmatpush.xpose.msra.mxu0 %v867
    %v869 = vand.u32 %v725, 4294901760
    %870 = vmatmul.f32.gmra.mxu0 %v869
    %v871 = vpop.f32.mrf.mxu0
    %v872 = vadd.f32 %v771, %v871
    %873 = vdwg.mxu0
    %v874 = vand.u32 %v724, 4294901760
    %v875 = vsub.f32 %v724, %v874
    %876 = vmatpush.xpose.msra.mxu0 %v875
    %v877 = vand.u32 %v723, 4294901760
    %v878 = vsub.f32 %v723, %v877
    %879 = vmatpush.xpose.msra.mxu0 %v878
    %v880 = vand.u32 %v722, 4294901760
    %v881 = vsub.f32 %v722, %v880
    %882 = vmatpush.xpose.msra.mxu0 %v881
    %v883 = vand.u32 %v721, 4294901760
    %v884 = vsub.f32 %v721, %v883
    %885 = vmatpush.xpose.msra.mxu0 %v884
    %v886 = vand.u32 %v720, 4294901760
    %v887 = vsub.f32 %v720, %v886
    %888 = vmatpush.xpose.msra.mxu0 %v887
    %v889 = vand.u32 %v719, 4294901760
    %v890 = vsub.f32 %v719, %v889
    %891 = vmatpush.xpose.msra.mxu0 %v890
    %v892 = vand.u32 %v718, 4294901760
    %v893 = vsub.f32 %v718, %v892
    %894 = vmatpush.xpose.msra.mxu0 %v893
    %v895 = vand.u32 %v717, 4294901760
    %v896 = vsub.f32 %v717, %v895
    %897 = vmatpush.xpose.msra.mxu0 %v896
    %v898 = vand.u32 %v716, 4294901760
    %v899 = vsub.f32 %v716, %v898
    %900 = vmatpush.xpose.msra.mxu0 %v899
    %v901 = vand.u32 %v715, 4294901760
    %v902 = vsub.f32 %v715, %v901
    %903 = vmatpush.xpose.msra.mxu0 %v902
    %v904 = vand.u32 %v714, 4294901760
    %v905 = vsub.f32 %v714, %v904
    %906 = vmatpush.xpose.msra.mxu0 %v905
    %v907 = vand.u32 %v713, 4294901760
    %v908 = vsub.f32 %v713, %v907
    %909 = vmatpush.xpose.msra.mxu0 %v908
    %v910 = vand.u32 %v712, 4294901760
    %v911 = vsub.f32 %v712, %v910
    %912 = vmatpush.xpose.msra.mxu0 %v911
    %v913 = vand.u32 %v711, 4294901760
    %v914 = vsub.f32 %v711, %v913
    %915 = vmatpush.xpose.msra.mxu0 %v914
    %v916 = vand.u32 %v710, 4294901760
    %v917 = vsub.f32 %v710, %v916
    %918 = vmatpush.xpose.msra.mxu0 %v917
    %v919 = vand.u32 %v709, 4294901760
    %v920 = vsub.f32 %v709, %v919
    %921 = vmatpush.xpose.msra.mxu0 %v920
    %v922 = vand.u32 %v725, 4294901760
    %v923 = vsub.f32 %v725, %v922
    %924 = vmatmul.f32.gmra.mxu0 %v923
    %v925 = vpop.f32.mrf.mxu0
    %v926 = vadd.f32 %v872, %v925
    %927 = vdwg.mxu0
    %v928 = vand.u32 %v724, 4294901760
    %929 = vmatpush.xpose.msra.mxu0 %v928
    %v930 = vand.u32 %v723, 4294901760
    %931 = vmatpush.xpose.msra.mxu0 %v930
    %v932 = vand.u32 %v722, 4294901760
    %933 = vmatpush.xpose.msra.mxu0 %v932
    %v934 = vand.u32 %v721, 4294901760
    %935 = vmatpush.xpose.msra.mxu0 %v934
    %v936 = vand.u32 %v720, 4294901760
    %937 = vmatpush.xpose.msra.mxu0 %v936
    %v938 = vand.u32 %v719, 4294901760
    %939 = vmatpush.xpose.msra.mxu0 %v938
    %v940 = vand.u32 %v718, 4294901760
    %941 = vmatpush.xpose.msra.mxu0 %v940
    %v942 = vand.u32 %v717, 4294901760
    %943 = vmatpush.xpose.msra.mxu0 %v942
    %v944 = vand.u32 %v716, 4294901760
    %945 = vmatpush.xpose.msra.mxu0 %v944
    %v946 = vand.u32 %v715, 4294901760
    %947 = vmatpush.xpose.msra.mxu0 %v946
    %v948 = vand.u32 %v714, 4294901760
    %949 = vmatpush.xpose.msra.mxu0 %v948
    %v950 = vand.u32 %v713, 4294901760
    %951 = vmatpush.xpose.msra.mxu0 %v950
    %v952 = vand.u32 %v712, 4294901760
    %953 = vmatpush.xpose.msra.mxu0 %v952
    %v954 = vand.u32 %v711, 4294901760
    %955 = vmatpush.xpose.msra.mxu0 %v954
    %v956 = vand.u32 %v710, 4294901760
    %957 = vmatpush.xpose.msra.mxu0 %v956
    %v958 = vand.u32 %v709, 4294901760
    %959 = vmatpush.xpose.msra.mxu0 %v958
    %v960 = vand.u32 %v725, 4294901760
    %v961 = vsub.f32 %v725, %v960
    %v962 = vand.u32 %v961, 4294901760
    %963 = vmatmul.f32.gmra.mxu0 %v962
    %v964 = vpop.f32.mrf.mxu0
    %v965 = vadd.f32 %v926, %v964
    %966 = vdwg.mxu0
    %v967 = vand.u32 %v724, 4294901760
    %v968 = vsub.f32 %v724, %v967
    %v969 = vand.u32 %v968, 4294901760
    %970 = vmatpush.xpose.msra.mxu0 %v969
    %v971 = vand.u32 %v723, 4294901760
    %v972 = vsub.f32 %v723, %v971
    %v973 = vand.u32 %v972, 4294901760
    %974 = vmatpush.xpose.msra.mxu0 %v973
    %v975 = vand.u32 %v722, 4294901760
    %v976 = vsub.f32 %v722, %v975
    %v977 = vand.u32 %v976, 4294901760
    %978 = vmatpush.xpose.msra.mxu0 %v977
    %v979 = vand.u32 %v721, 4294901760
    %v980 = vsub.f32 %v721, %v979
    %v981 = vand.u32 %v980, 4294901760
    %982 = vmatpush.xpose.msra.mxu0 %v981
    %v983 = vand.u32 %v720, 4294901760
    %v984 = vsub.f32 %v720, %v983
    %v985 = vand.u32 %v984, 4294901760
    %986 = vmatpush.xpose.msra.mxu0 %v985
    %v987 = vand.u32 %v719, 4294901760
    %v988 = vsub.f32 %v719, %v987
    %v989 = vand.u32 %v988, 4294901760
    %990 = vmatpush.xpose.msra.mxu0 %v989
    %v991 = vand.u32 %v718, 4294901760
    %v992 = vsub.f32 %v718, %v991
    %v993 = vand.u32 %v992, 4294901760
    %994 = vmatpush.xpose.msra.mxu0 %v993
    %v995 = vand.u32 %v717, 4294901760
    %v996 = vsub.f32 %v717, %v995
    %v997 = vand.u32 %v996, 4294901760
    %998 = vmatpush.xpose.msra.mxu0 %v997
    %v999 = vand.u32 %v716, 4294901760
    %v1000 = vsub.f32 %v716, %v999
    %v1001 = vand.u32 %v1000, 4294901760
    %1002 = vmatpush.xpose.msra.mxu0 %v1001
    %v1003 = vand.u32 %v715, 4294901760
    %v1004 = vsub.f32 %v715, %v1003
    %v1005 = vand.u32 %v1004, 4294901760
    %1006 = vmatpush.xpose.msra.mxu0 %v1005
    %v1007 = vand.u32 %v714, 4294901760
    %v1008 = vsub.f32 %v714, %v1007
    %v1009 = vand.u32 %v1008, 4294901760
    %1010 = vmatpush.xpose.msra.mxu0 %v1009
    %v1011 = vand.u32 %v713, 4294901760
    %v1012 = vsub.f32 %v713, %v1011
    %v1013 = vand.u32 %v1012, 4294901760
    %1014 = vmatpush.xpose.msra.mxu0 %v1013
    %v1015 = vand.u32 %v712, 4294901760
    %v1016 = vsub.f32 %v712, %v1015
    %v1017 = vand.u32 %v1016, 4294901760
    %1018 = vmatpush.xpose.msra.mxu0 %v1017
    %v1019 = vand.u32 %v711, 4294901760
    %v1020 = vsub.f32 %v711, %v1019
    %v1021 = vand.u32 %v1020, 4294901760
    %1022 = vmatpush.xpose.msra.mxu0 %v1021
    %v1023 = vand.u32 %v710, 4294901760
    %v1024 = vsub.f32 %v710, %v1023
    %v1025 = vand.u32 %v1024, 4294901760
    %1026 = vmatpush.xpose.msra.mxu0 %v1025
    %v1027 = vand.u32 %v709, 4294901760
    %v1028 = vsub.f32 %v709, %v1027
    %v1029 = vand.u32 %v1028, 4294901760
    %1030 = vmatpush.xpose.msra.mxu0 %v1029
    %v1031 = vand.u32 %v725, 4294901760
    %1032 = vmatmul.f32.gmra.mxu0 %v1031
    %v1033 = vpop.f32.mrf.mxu0
    %v1034 = vadd.f32 %v965, %v1033
    %1035 = vdwg.mxu0
    %v1036 = vand.u32 %v724, 4294901760
    %1037 = vmatpush.xpose.msra.mxu0 %v1036
    %v1038 = vand.u32 %v723, 4294901760
    %1039 = vmatpush.xpose.msra.mxu0 %v1038
    %v1040 = vand.u32 %v722, 4294901760
    %1041 = vmatpush.xpose.msra.mxu0 %v1040
    %v1042 = vand.u32 %v721, 4294901760
    %1043 = vmatpush.xpose.msra.mxu0 %v1042
    %v1044 = vand.u32 %v720, 4294901760
    %1045 = vmatpush.xpose.msra.mxu0 %v1044
    %v1046 = vand.u32 %v719, 4294901760
    %1047 = vmatpush.xpose.msra.mxu0 %v1046
    %v1048 = vand.u32 %v718, 4294901760
    %1049 = vmatpush.xpose.msra.mxu0 %v1048
    %v1050 = vand.u32 %v717, 4294901760
    %1051 = vmatpush.xpose.msra.mxu0 %v1050
    %v1052 = vand.u32 %v716, 4294901760
    %1053 = vmatpush.xpose.msra.mxu0 %v1052
    %v1054 = vand.u32 %v715, 4294901760
    %1055 = vmatpush.xpose.msra.mxu0 %v1054
    %v1056 = vand.u32 %v714, 4294901760
    %1057 = vmatpush.xpose.msra.mxu0 %v1056
    %v1058 = vand.u32 %v713, 4294901760
    %1059 = vmatpush.xpose.msra.mxu0 %v1058
    %v1060 = vand.u32 %v712, 4294901760
    %1061 = vmatpush.xpose.msra.mxu0 %v1060
    %v1062 = vand.u32 %v711, 4294901760
    %1063 = vmatpush.xpose.msra.mxu0 %v1062
    %v1064 = vand.u32 %v710, 4294901760
    %1065 = vmatpush.xpose.msra.mxu0 %v1064
    %v1066 = vand.u32 %v709, 4294901760
    %1067 = vmatpush.xpose.msra.mxu0 %v1066
    %v1068 = vand.u32 %v725, 4294901760
    %1069 = vmatmul.f32.gmra.mxu0 %v1068
    %v1070 = vpop.f32.mrf.mxu0
    %v1071 = vadd.f32 %v1034, %v1070
    %1072 = vdwg.mxu0
    %vm1073 = vcmask 1043456
    %v1074 = vsel %vm1073, %v1071, -inf
    %v1075 = vrot.slane %v1074, 4
    %v1076 = vmax.f32 %v1074, %v1075
    %v1077 = vrot.slane %v1076, 2
    %v1078 = vmax.f32 %v1076, %v1077
    %v1079 = vrot.slane %v1078, 1
    %v1080 = vmax.f32 %v1078, %v1079
    %v1081 = vsub.f32 %v1071, %v1080
    %v1082 = vmul.f32 %v1081, 1.442695
    %v1083 = vpow.pop %v1082
    %v1084 = vsel %vm1073, %v1083, 0.0
    %v1085 = vrot.slane %v1084, 4
    %v1086 = vadd.f32 %v1084, %v1085
    %v1087 = vrot.slane %v1086, 2
    %v1088 = vadd.f32 %v1086, %v1087
    %v1089 = vrot.slane %v1088, 1
    %v1090 = vadd.f32 %v1088, %v1089
    %v1091 = vlog2.pop %v1090
    %v1092 = vmul.f32 %v1091, 0.6931472
    %v1093 = vadd.f32 %v1092, %v1080
    %v1094 = vsub.f32 %v1071, %v1093
    %1095 = vst [vmem:[#allocation2] sm:$0xf] %v1094
    %1096 = vst [vmem:[#allocation4 - $0x4] sm:$0x10] %v1071
    // Predicated region
    $region22: #{gflownet_forward.1} parent=1 // pred_check
      _
    $region23: #{gflownet_forward.1} parent=1 // pred_check_branch
      %1098 = sbr.rel (0) target = $region25
    $region24: #{gflownet_forward.1} parent=1 // pred_region
      %1100 = vsyncadd [#allocation3], 0
      %s1102 = sshll.u32 [#allocation2], 4
      %s1103 = int_to_ptr.vmem [resolvable:$true] %s1102
      %s1104 = sshll.u32 %s5, 4
      %s1105 = int_to_ptr.hbm [resolvable:$true] %s1104
      %1107 = dma.vmem_to_hbm [thread:$0]  %s1103, 64, %s1105, [#allocation3]
    $region25: #{gflownet_forward.1} parent=1 // pred_fallthru
      _
    // Predicated region
    $region26: #{gflownet_forward.1} parent=1 // pred_check
      _
    $region27: #{gflownet_forward.1} parent=1 // pred_check_branch
      %1109 = sbr.rel (0) target = $region29
    $region28: #{gflownet_forward.1} parent=1 // pred_region
      %1111 = vsyncadd [#allocation5], 0
      %s1113 = sshll.u32 [#allocation4], 4
      %s1114 = int_to_ptr.vmem [resolvable:$true] %s1113
      %s1115 = sshll.u32 %s6, 4
      %s1116 = int_to_ptr.hbm [resolvable:$true] %s1115
      %1118 = dma.vmem_to_hbm [thread:$0]  %s1114, 16, %s1116, [#allocation5]
    $region29: #{gflownet_forward.1} parent=1 // pred_fallthru
      _
    // Predicated region
    $region30: #{gflownet_forward.1} parent=1 // pred_check
      _
    $region31: #{gflownet_forward.1} parent=1 // pred_check_branch
      %1120 = sbr.rel (0) target = $region33
    $region32: #{gflownet_forward.1} parent=1 // pred_region
      %1122 = dma.done [#allocation3], 64
    $region33: #{gflownet_forward.1} parent=1 // pred_fallthru
      _
    // Predicated region
    $region34: #{gflownet_forward.1} parent=1 // pred_check
      _
    $region35: #{gflownet_forward.1} parent=1 // pred_check_branch
      %1124 = sbr.rel (0) target = $region37
    $region36: #{gflownet_forward.1} parent=1 // pred_region
      %1126 = dma.done [#allocation5], 16
    $region37: #{gflownet_forward.1} parent=1 // pred_fallthru
      _
    %1127 = vsyncpa [#allocation3], 1
    %1128 = vsyncpa [#allocation5], 1

</llo_original>
